<compile_context>
chip_gen: v6e
topology: v6e:2x2x1
jax: 0.10.0
libtpu: 0.0.40
codegen_flags: <defaults>
</compile_context>

<pallas_src>
import functools

import jax
import jax.numpy as jnp
from jax import lax
from jax.experimental import pallas as pl
from jax.experimental.pallas import tpu as pltpu

_NEG_PAD = -1e30  # big-negative bias for padded vocab columns (exp -> 0, no inf/nan)


def _round_up(x, m):
    return (x + m - 1) // m * m


def _generator_kernel(x_ref, wt_ref, b_ref, o_ref, m_ref, l_ref, *,
                      n_vocab_tiles, tn, unroll):
    """One (row-tile i, vocab-tile j) grid step.

    x_ref:  (TM, H)    input rows (bf16/compute dtype, resident across j)
    wt_ref: (H, TN)    streamed weight column tile (bf16/compute dtype)
    b_ref:  (1, TN)    bias column tile (f32, padded cols = -1e30)
    o_ref:  (TM, Vp)   f32 output, VMEM-resident across j (doubles as logit stash)
    m_ref:  (TM, 128)  running row max (f32, all lanes equal -> unmasked stores)
    l_ref:  (TM, 128)  running sum of exp (f32, all lanes equal)
    """
    j = pl.program_id(1)

    @pl.when(j == 0)
    def _init():
        m_ref[...] = jnp.full_like(m_ref, -jnp.inf)
        l_ref[...] = jnp.zeros_like(l_ref)

    # Linear: logits tile on the MXU (bf16 operands, f32 accumulation).
    logits = jnp.dot(x_ref[...], wt_ref[...], preferred_element_type=jnp.float32)
    logits = logits + b_ref[...]

    # Online log-sum-exp update (EUP exp overlaps next tile's weight DMA / matmul).
    m_prev = m_ref[...]                                    # (TM, 128), lanes equal
    tile_max = jnp.max(logits, axis=-1, keepdims=True)     # (TM, 1)
    m_new = jnp.maximum(m_prev, tile_max)                  # (TM, 128)
    p_sum = jnp.sum(jnp.exp(logits - m_new[:, :1]), axis=-1, keepdims=True)
    l_ref[...] = jnp.exp(m_prev - m_new) * l_ref[...] + p_sum
    m_ref[...] = m_new

    # Stage raw logits directly in the resident f32 output slab (no extra stash).
    col0 = pl.multiple_of(j * tn, 128)
    o_ref[:, pl.ds(col0, tn)] = logits

    @pl.when(j == n_vocab_tiles - 1)
    def _finalize():
        lse = (m_ref[...] + jnp.log(l_ref[...]))[:, :1]    # (TM, 1)

        def body(k, carry):
            start = pl.multiple_of(k * tn, 128)
            o_ref[:, pl.ds(start, tn)] = o_ref[:, pl.ds(start, tn)] - lse
            return carry

        lax.fori_loop(0, n_vocab_tiles, body, 0, unroll=unroll)


def prepare_generator_params(weight, bias, *, tn=1024, compute_dtype=jnp.bfloat16):
    """One-time parameter prep (transpose + dtype cast + lane padding).

    weight: (output_size, hidden)  -- PyTorch nn.Linear layout
    bias:   (output_size,)
    """
    out_size, hidden = weight.shape
    tn = _round_up(max(tn, 128), 128)
    tn = min(tn, _round_up(out_size, 128))
    vp = _round_up(out_size, tn)

    wt = weight.T.astype(compute_dtype)        # transposed + cast once, off hot path
    b = bias.astype(jnp.float32)
    if vp != out_size:
        wt = jnp.pad(wt, ((0, 0), (0, vp - out_size)))
        b = jnp.pad(b, (0, vp - out_size), constant_values=_NEG_PAD)
    return {"wt": wt, "b": b.reshape(1, vp), "out_size": out_size, "tn": tn,
            "compute_dtype": compute_dtype}


def _vmem_budget_bytes():
    """Generation-aware VMEM budget: leave ~16 MiB headroom for compiler scratch."""
    try:
        phys = int(pltpu.get_tpu_info().vmem_capacity_bytes)
    except Exception:
        phys = 64 * 1024 * 1024  # conservative (v7x-sized) fallback
    return max(phys - 16 * 1024 * 1024, phys * 3 // 4)


def _vmem_usage(tm, hidden, vp, tn, x_bytes, w_bytes):
    return (2 * tm * vp * 4            # resident f32 output slab, double-buffered
            + 2 * tm * hidden * x_bytes  # x tile, double-buffered
            + 2 * hidden * tn * w_bytes  # streamed weight tile, double-buffered
            + 2 * tn * 4                 # bias tile
            + 2 * tm * 128 * 4)          # m / l scratch


def _pick_tm(rows, hidden, vp, tn, x_bytes, w_bytes, budget, tm_max):
    rows_cap = _round_up(rows, 8)
    tm = max(8, min(_round_up(tm_max, 8), rows_cap))
    while tm > 8 and _vmem_usage(tm, hidden, vp, tn, x_bytes, w_bytes) > budget * 9 // 10:
        tm = max(8, _round_up(tm // 2, 8))
    return tm


def generator_forward(x, params, *, tm=256):
    """x: (..., hidden) -> log-probabilities (..., output_size)."""
    wt = params["wt"]          # (H, Vp) compute dtype (bf16 by default)
    b2d = params["b"]          # (1, Vp) f32
    out_size = params["out_size"]
    tn = params["tn"]
    compute_dtype = params["compute_dtype"]
    hidden, vp = wt.shape
    assert x.shape[-1] == hidden

    orig_shape = x.shape
    orig_dtype = x.dtype
    x2d = x.reshape(-1, hidden).astype(compute_dtype)
    rows = x2d.shape[0]

    budget = int(_vmem_budget_bytes())
    tm = _pick_tm(rows, hidden, vp, tn,
                  x2d.dtype.itemsize, wt.dtype.itemsize, budget, tm)

    rows_p = _round_up(rows, tm)
    if rows_p != rows:
        x2d = jnp.pad(x2d, ((0, rows_p - rows), (0, 0)))

    n_row_tiles = rows_p // tm
    n_vocab_tiles = vp // tn

    kernel = functools.partial(
        _generator_kernel,
        n_vocab_tiles=n_vocab_tiles, tn=tn, unroll=min(4, n_vocab_tiles))

    cost = pl.CostEstimate(
        flops=2 * rows_p * hidden * vp,
        transcendentals=rows_p * vp,
        bytes_accessed=(x2d.size * x2d.dtype.itemsize
                        + n_row_tiles * wt.size * wt.dtype.itemsize
                        + n_row_tiles * b2d.size * b2d.dtype.itemsize
                        + rows_p * vp * 4),
    )

    out = pl.pallas_call(
        kernel,
        out_shape=jax.ShapeDtypeStruct((rows_p, vp), jnp.float32),
        grid_spec=pltpu.PrefetchScalarGridSpec(
            num_scalar_prefetch=0,
            grid=(n_row_tiles, n_vocab_tiles),
            in_specs=[
                pl.BlockSpec((tm, hidden), lambda i, j: (i, 0)),   # rows, j-invariant
                pl.BlockSpec((hidden, tn), lambda i, j: (0, j)),   # streamed weight cols
                pl.BlockSpec((1, tn), lambda i, j: (0, j)),        # bias cols
            ],
            out_specs=pl.BlockSpec((tm, vp), lambda i, j: (i, 0)),  # resident across j
            scratch_shapes=[
                pltpu.VMEM((tm, 128), jnp.float32),                 # running max
                pltpu.VMEM((tm, 128), jnp.float32),                 # running sum
            ],
        ),
        compiler_params=pltpu.CompilerParams(
            dimension_semantics=("parallel", "arbitrary"),
            vmem_limit_bytes=budget,
        ),
        cost_estimate=cost,
    )(x2d, wt, b2d)

    if rows_p != rows or vp != out_size:
        out = out[:rows, :out_size]
    if orig_dtype != jnp.float32:
        out = out.astype(orig_dtype)
    return out.reshape(*orig_shape[:-1], out_size)


if __name__ == "__main__":
    # Small shapes: (batch, seq, hidden) -> (batch, seq, output_size)
    batch, seq, hidden, output_size = 2, 8, 32, 200

    key = jax.random.PRNGKey(0)
    kx, kw, kb = jax.random.split(key, 3)

    x = jax.random.normal(kx, (batch, seq, hidden), dtype=jnp.float32)
    # PyTorch nn.Linear(hidden, output_size) parameter shapes
    weight = jax.random.normal(kw, (output_size, hidden), dtype=jnp.float32) * 0.1
    bias = jax.random.normal(kb, (output_size,), dtype=jnp.float32) * 0.1

    # Small tiles so the test exercises multiple row tiles, multiple vocab tiles,
    # vocab padding (200 -> 256), the in-slab staging and the fori_loop finalize.
    params = prepare_generator_params(weight, bias, tn=128)
    y = generator_forward(x, params, tm=8)
    y = jax.block_until_ready(y)

    # Reference in plain JAX with matching bf16-operand / f32-accumulate precision.
    logits_ref = jnp.dot(
        x.reshape(-1, hidden).astype(jnp.bfloat16),
        weight.T.astype(jnp.bfloat16),
        preferred_element_type=jnp.float32,
    ).reshape(batch, seq, output_size) + bias
    ref = jax.nn.log_softmax(logits_ref, axis=-1)

    assert y.shape == (batch, seq, output_size)
    assert jnp.allclose(y, ref, atol=1e-3, rtol=1e-3), float(jnp.max(jnp.abs(y - ref)))

    print("KERNEL_OK")
</pallas_src>

<mosaic_0001>
module attributes {stable_mosaic.version = 11 : i64} {
  func.func @_generator_kernel(%arg0: i32, %arg1: i32, %arg2: memref<8x32xbf16, #tpu.memory_space<vmem>>, %arg3: memref<32x128xbf16, #tpu.memory_space<vmem>>, %arg4: memref<1x128xf32, #tpu.memory_space<vmem>>, %arg5: memref<8x256xf32, #tpu.memory_space<vmem>>, %arg6: memref<8x128xf32, #tpu.memory_space<vmem>>, %arg7: memref<8x128xf32, #tpu.memory_space<vmem>>) attributes {dimension_semantics = [#tpu.dimension_semantics<parallel>, #tpu.dimension_semantics<arbitrary>], iteration_bounds = array<i64: 2, 2>, scalar_prefetch = 0 : i64, scratch_operands = 2 : i64, tpu.core_type = #tpu.core_type<tc>, window_params = [{transform_indices = @transform_0, window_bounds = array<i64: 8, 32>}, {transform_indices = @transform_1, window_bounds = array<i64: 32, 128>}, {transform_indices = @transform_2, window_bounds = array<i64: 1, 128>}, {transform_indices = @transform_3, window_bounds = array<i64: 8, 256>}]} {
    %c0_i32 = arith.constant 0 : i32
    %0 = arith.cmpi eq, %arg1, %c0_i32 : i32
    %1 = arith.extui %0 : i1 to i32
    %c0_i32_0 = arith.constant 0 : i32
    %2 = arith.cmpi ne, %1, %c0_i32_0 : i32
    scf.if %2 {
      %cst_18 = arith.constant 0xFF800000 : f32
      %35 = vector.broadcast %cst_18 : f32 to vector<8x128xf32>
      %c0_19 = arith.constant 0 : index
      %c0_20 = arith.constant 0 : index
      %36 = vector.load %arg6[%c0_19, %c0_20] : memref<8x128xf32, #tpu.memory_space<vmem>>, vector<8x128xf32>
      tpu.vector_store %arg6[%c0_19, %c0_20], %35 {strides = array<i32>} : memref<8x128xf32, #tpu.memory_space<vmem>>, vector<8x128xf32>,
      %cst_21 = arith.constant 0.000000e+00 : f32
      %37 = vector.broadcast %cst_21 : f32 to vector<8x128xf32>
      %c0_22 = arith.constant 0 : index
      %c0_23 = arith.constant 0 : index
      %38 = vector.load %arg7[%c0_22, %c0_23] : memref<8x128xf32, #tpu.memory_space<vmem>>, vector<8x128xf32>
      tpu.vector_store %arg7[%c0_22, %c0_23], %37 {strides = array<i32>} : memref<8x128xf32, #tpu.memory_space<vmem>>, vector<8x128xf32>,
    } else {
    }
    %c0 = arith.constant 0 : index
    %c0_1 = arith.constant 0 : index
    %3 = vector.load %arg2[%c0, %c0_1] : memref<8x32xbf16, #tpu.memory_space<vmem>>, vector<8x32xbf16>
    %c0_2 = arith.constant 0 : index
    %c0_3 = arith.constant 0 : index
    %4 = vector.load %arg3[%c0_2, %c0_3] : memref<32x128xbf16, #tpu.memory_space<vmem>>, vector<32x128xbf16>
    %cst = arith.constant dense<0.000000e+00> : vector<8x128xf32>
    %5 = tpu.matmul %3, %4, %cst {dimension_numbers = #tpu.dot_dimension_numbers<[1], [0], [0], [1], [0, 0, 1, 1], [], []>} : vector<8x32xbf16>, vector<32x128xbf16>, vector<8x128xf32> -> vector<8x128xf32>
    %c0_4 = arith.constant 0 : index
    %c0_5 = arith.constant 0 : index
    %6 = vector.load %arg4[%c0_4, %c0_5] : memref<1x128xf32, #tpu.memory_space<vmem>>, vector<1x128xf32>
    %7 = vector.broadcast %6 : vector<1x128xf32> to vector<8x128xf32>
    %8 = arith.addf %5, %7 : vector<8x128xf32>
    %c0_6 = arith.constant 0 : index
    %c0_7 = arith.constant 0 : index
    %9 = vector.load %arg6[%c0_6, %c0_7] : memref<8x128xf32, #tpu.memory_space<vmem>>, vector<8x128xf32>
    %cst_8 = arith.constant dense<0xFF800000> : vector<8xf32>
    %10 = vector.multi_reduction <maximumf>, %8, %cst_8 [1] : vector<8x128xf32> to vector<8xf32>
    %11 = vector.shape_cast %10 : vector<8xf32> to vector<8x1xf32>
    %12 = vector.broadcast %11 : vector<8x1xf32> to vector<8x128xf32>
    %13 = arith.maximumf %9, %12 : vector<8x128xf32>
    %14 = vector.extract_strided_slice %13 {offsets = [0, 0], sizes = [8, 1], strides = [1, 1]} : vector<8x128xf32> to vector<8x1xf32>
    %15 = vector.broadcast %14 : vector<8x1xf32> to vector<8x128xf32>
    %16 = arith.subf %8, %15 : vector<8x128xf32>
    %17 = math.exp %16 : vector<8x128xf32>
    %cst_9 = arith.constant dense<0.000000e+00> : vector<8xf32>
    %18 = vector.multi_reduction <add>, %17, %cst_9 [1] : vector<8x128xf32> to vector<8xf32>
    %19 = vector.shape_cast %18 : vector<8xf32> to vector<8x1xf32>
    %20 = arith.subf %9, %13 : vector<8x128xf32>
    %21 = math.exp %20 : vector<8x128xf32>
    %c0_10 = arith.constant 0 : index
    %c0_11 = arith.constant 0 : index
    %22 = vector.load %arg7[%c0_10, %c0_11] : memref<8x128xf32, #tpu.memory_space<vmem>>, vector<8x128xf32>
    %23 = arith.mulf %21, %22 : vector<8x128xf32>
    %24 = vector.broadcast %19 : vector<8x1xf32> to vector<8x128xf32>
    %25 = arith.addf %23, %24 : vector<8x128xf32>
    %c0_12 = arith.constant 0 : index
    %c0_13 = arith.constant 0 : index
    %26 = vector.load %arg7[%c0_12, %c0_13] : memref<8x128xf32, #tpu.memory_space<vmem>>, vector<8x128xf32>
    tpu.vector_store %arg7[%c0_12, %c0_13], %25 {strides = array<i32>} : memref<8x128xf32, #tpu.memory_space<vmem>>, vector<8x128xf32>,
    %c0_14 = arith.constant 0 : index
    %c0_15 = arith.constant 0 : index
    %27 = vector.load %arg6[%c0_14, %c0_15] : memref<8x128xf32, #tpu.memory_space<vmem>>, vector<8x128xf32>
    tpu.vector_store %arg6[%c0_14, %c0_15], %13 {strides = array<i32>} : memref<8x128xf32, #tpu.memory_space<vmem>>, vector<8x128xf32>,
    %c128_i32 = arith.constant 128 : i32
    %28 = arith.muli %arg1, %c128_i32 : i32
    %29 = tpu.assume_multiple %28, 128 : i32
    %c0_16 = arith.constant 0 : index
    %30 = arith.index_cast %29 : i32 to index
    %31 = vector.load %arg5[%c0_16, %30] : memref<8x256xf32, #tpu.memory_space<vmem>>, vector<8x128xf32>
    tpu.vector_store %arg5[%c0_16, %30], %8 {strides = array<i32>} : memref<8x256xf32, #tpu.memory_space<vmem>>, vector<8x128xf32>,
    %c1_i32 = arith.constant 1 : i32
    %32 = arith.cmpi eq, %arg1, %c1_i32 : i32
    %33 = arith.extui %32 : i1 to i32
    %c0_i32_17 = arith.constant 0 : i32
    %34 = arith.cmpi ne, %33, %c0_i32_17 : i32
    scf.if %34 {
      %c0_18 = arith.constant 0 : index
      %c0_19 = arith.constant 0 : index
      %35 = vector.load %arg6[%c0_18, %c0_19] : memref<8x128xf32, #tpu.memory_space<vmem>>, vector<8x128xf32>
      %c0_20 = arith.constant 0 : index
      %c0_21 = arith.constant 0 : index
      %36 = vector.load %arg7[%c0_20, %c0_21] : memref<8x128xf32, #tpu.memory_space<vmem>>, vector<8x128xf32>
      %37 = math.log %36 : vector<8x128xf32>
      %38 = arith.addf %35, %37 : vector<8x128xf32>
      %39 = vector.extract_strided_slice %38 {offsets = [0, 0], sizes = [8, 1], strides = [1, 1]} : vector<8x128xf32> to vector<8x1xf32>
      %c0_i32_22 = arith.constant 0 : i32
      %c128_i32_23 = arith.constant 128 : i32
      %40 = arith.muli %c0_i32_22, %c128_i32_23 : i32
      %41 = tpu.assume_multiple %40, 128 : i32
      %c0_24 = arith.constant 0 : index
      %42 = arith.index_cast %41 : i32 to index
      %43 = vector.load %arg5[%c0_24, %42] : memref<8x256xf32, #tpu.memory_space<vmem>>, vector<8x128xf32>
      %44 = vector.broadcast %39 : vector<8x1xf32> to vector<8x128xf32>
      %45 = arith.subf %43, %44 : vector<8x128xf32>
      %c0_25 = arith.constant 0 : index
      %46 = arith.index_cast %41 : i32 to index
      %47 = vector.load %arg5[%c0_25, %46] : memref<8x256xf32, #tpu.memory_space<vmem>>, vector<8x128xf32>
      tpu.vector_store %arg5[%c0_25, %46], %45 {strides = array<i32>} : memref<8x256xf32, #tpu.memory_space<vmem>>, vector<8x128xf32>,
      %c1_i32_26 = arith.constant 1 : i32
      %c128_i32_27 = arith.constant 128 : i32
      %48 = arith.muli %c1_i32_26, %c128_i32_27 : i32
      %49 = tpu.assume_multiple %48, 128 : i32
      %c0_28 = arith.constant 0 : index
      %50 = arith.index_cast %49 : i32 to index
      %51 = vector.load %arg5[%c0_28, %50] : memref<8x256xf32, #tpu.memory_space<vmem>>, vector<8x128xf32>
      %52 = vector.broadcast %39 : vector<8x1xf32> to vector<8x128xf32>
      %53 = arith.subf %51, %52 : vector<8x128xf32>
      %c0_29 = arith.constant 0 : index
      %54 = arith.index_cast %49 : i32 to index
      %55 = vector.load %arg5[%c0_29, %54] : memref<8x256xf32, #tpu.memory_space<vmem>>, vector<8x128xf32>
      tpu.vector_store %arg5[%c0_29, %54], %53 {strides = array<i32>} : memref<8x256xf32, #tpu.memory_space<vmem>>, vector<8x128xf32>,
      %c2_i32 = arith.constant 2 : i32
    } else {
    }
    return
  }
  func.func @transform_0(%arg0: i32, %arg1: i32) -> (i32, i32) {
    %c0_i32 = arith.constant 0 : i32
    %c0_i32_0 = arith.constant 0 : i32
    return %arg0, %c0_i32 : i32, i32
  }
  func.func @transform_1(%arg0: i32, %arg1: i32) -> (i32, i32) {
    %c0_i32 = arith.constant 0 : i32
    %c0_i32_0 = arith.constant 0 : i32
    return %c0_i32, %arg1 : i32, i32
  }
  func.func @transform_2(%arg0: i32, %arg1: i32) -> (i32, i32) {
    %c0_i32 = arith.constant 0 : i32
    %c0_i32_0 = arith.constant 0 : i32
    return %c0_i32, %arg1 : i32, i32
  }
  func.func @transform_3(%arg0: i32, %arg1: i32) -> (i32, i32) {
    %c0_i32 = arith.constant 0 : i32
    %c0_i32_0 = arith.constant 0 : i32
    return %arg0, %c0_i32 : i32, i32
  }
}

</mosaic_0001>

<llo_original>
// kernel: tpu_custom_call.1
$region0: #{tpu_custom_call.1}
  #allocation0 [shape = 'u32[]', space=smem, size = 0x4, offset = 0x4, fixed_abs, tag = 'smem constant byte address 0x4 - core index']
  #allocation1 [shape = 'u32[144,128]{1,0:T(1,128)}', space=vmem, size = 0x12000, scoped, tag = 'internal scratch']
  #allocation2 [shape = 'f32[8,128]{1,0:T(8,128)}', space=vmem, size = 0x1000, scoped, tag = 'scratch operand']
  #allocation3 [shape = 'f32[8,128]{1,0:T(8,128)}', space=vmem, size = 0x1000, scoped, tag = 'scratch operand']
  %s0 = inlined_call_operand.hbm [shape: bf16[16,32], index: 0, kind: input, shape index: {}]
  %s1 = inlined_call_operand.hbm [shape: bf16[32,256], index: 1, kind: input, shape index: {}]
  %s2 = inlined_call_operand.vmem [shape: f32[1,256], index: 2, kind: input, shape index: {}]
  %s3 = inlined_call_operand.hbm [shape: f32[16,256], index: 3, kind: output, shape index: {}]
  %s4 = sld [smem:[#allocation0]]
  $region61: #{tpu_custom_call.1} parent=0
    _
  %s6 = ssub.s32 1, %s4
  %s7 = scalar_select 0, %s6, %s4
  $region1: #{tpu_custom_call.1} parent=0
    #allocation4 [shape = 'u8[4096]{0}', space=vmem, size = 0x1000, scoped, tag = 'input window, operand 0']
    #allocation5 [shape = 's32[2]{0}', space=sflag, size = 0x8, scoped, tag = 'scoped memory for tpu_custom_call.1']
    #allocation6 [shape = 's32[2]{0}', space=sflag, size = 0x8, scoped, tag = 'scoped memory for tpu_custom_call.1']
    #allocation7 [shape = 'u8[16384]{0}', space=vmem, size = 0x4000, scoped, tag = 'input window, operand 1']
    #allocation8 [shape = 's32[2]{0}', space=sflag, size = 0x8, scoped, tag = 'scoped memory for tpu_custom_call.1']
    #allocation9 [shape = 'u8[16384]{0}', space=vmem, size = 0x4000, scoped, tag = 'output window, operand 0']
    %8 = vsyncpa [#allocation5], 0
    %s9 = scalar_lea.sflag [#allocation5], 1
    %10 = vsyncpa %s9, 0
    %11 = vsyncpa [#allocation8], 0
    %s12 = scalar_lea.sflag [#allocation8], 1
    %13 = vsyncpa %s12, 0
    %14 = vsyncpa [#allocation6], 0
    %s15 = scalar_lea.sflag [#allocation6], 1
    %16 = vsyncpa %s15, 0
    loop: start=0, step=1, limit=6
    $region2: #{tpu_custom_call.1} parent=1 // loop_pre_header
      _
    $region3: #{tpu_custom_call.1} parent=1 // loop_header
      %s18 = sphi 0, %s22
      %p19 = scmp.ge.s32.totalorder %s18, 6
      %s25 = sphi 0, %s37
      %s26 = sphi 0, %s33
      %s27 = sphi 0, %s25
      %s28 = sphi 0, %s26
      %s29 = sphi 0, %s27
      %s30 = sphi 0, %s28
      %s40 = sphi 0, %s42
      %s43 = sphi 0, %s40
      %s44 = sphi 0, %s43
      %s60 = sphi 0, %s44
      %s66 = sphi 0, %s68
      %s69 = sphi 0, %s66
      %s70 = sphi 0, %s69
      %s86 = sphi 0, %s70
      %s92 = sphi 0, %s94
      %s95 = sphi 0, %s92
      %s96 = sphi 0, %s95
      %s112 = sphi 0, %s96
      %s118 = sphi 0, %s120
      %s121 = sphi 0, %s118
      %s122 = sphi 0, %s121
      %s138 = sphi 0, %s122
    $region4: #{tpu_custom_call.1} parent=1 // loop_header_branch
      %21 = sbr.rel (%p19) target = $region8
    $region5: #{tpu_custom_call.1} parent=1 // loop_body
      %s23 = ssub.s32 %s18, 1
      %s24 = ssub.s32 %s18, 2
      %s31 = sadd.s32 1, %s26
      %p32 = scmp.ge.s32.totalorder %s31, 2
      %s33 = scalar_select %p32, 0, %s31
      %s34 = sadd.s32 1, %s25
      %s35 = scalar_select %p32, %s34, %s25
      %p36 = scmp.ge.s32.totalorder %s35, 2
      %s37 = scalar_select %p36, 0, %s35
      %s38 = ssub.s32 %s25, %s37
      %p39 = scmp.eq.s32.totalorder %s38, 0
      %s41 = sadd.s32 %s40, 1
      %s42 = scalar_select %p39, %s40, %s41
      %p45 = pneg %p39
      %p46 = scmp.eq.s32.totalorder %s18, 3
      %p47 = por %p45, %p46
      %p48 = scmp.ne.s32.totalorder %s40, %s43
      %p49 = scmp.eq.s32.totalorder %s18, 0
      %p50 = por %p48, %p49
      %p51 = scmp.ne.s32.totalorder %s40, %s43
      %p52 = scmp.eq.s32.totalorder %s23, 3
      %p53 = por %p51, %p52
      %p54 = scmp.ne.s32.totalorder %s43, %s44
      %p55 = scmp.eq.s32.totalorder %s23, 0
      %p56 = por %p54, %p55
      %p57 = scmp.ne.s32.totalorder %s43, %s44
      %p58 = scmp.eq.s32.totalorder %s24, 3
      %p59 = por %p57, %p58
      %p61 = scmp.ne.s32.totalorder %s44, %s60
      %p62 = scmp.eq.s32.totalorder %s24, 0
      %p63 = por %p61, %p62
      %s64 = ssub.s32 %s26, %s33
      %p65 = scmp.eq.s32.totalorder %s64, 0
      %s67 = sadd.s32 %s66, 1
      %s68 = scalar_select %p65, %s66, %s67
      %p71 = pneg %p65
      %p72 = scmp.eq.s32.totalorder %s18, 3
      %p73 = por %p71, %p72
      %p74 = scmp.ne.s32.totalorder %s66, %s69
      %p75 = scmp.eq.s32.totalorder %s18, 0
      %p76 = por %p74, %p75
      %p77 = scmp.ne.s32.totalorder %s66, %s69
      %p78 = scmp.eq.s32.totalorder %s23, 3
      %p79 = por %p77, %p78
      %p80 = scmp.ne.s32.totalorder %s69, %s70
      %p81 = scmp.eq.s32.totalorder %s23, 0
      %p82 = por %p80, %p81
      %p83 = scmp.ne.s32.totalorder %s69, %s70
      %p84 = scmp.eq.s32.totalorder %s24, 3
      %p85 = por %p83, %p84
      %p87 = scmp.ne.s32.totalorder %s70, %s86
      %p88 = scmp.eq.s32.totalorder %s24, 0
      %p89 = por %p87, %p88
      %s90 = ssub.s32 %s26, %s33
      %p91 = scmp.eq.s32.totalorder %s90, 0
      %s93 = sadd.s32 %s92, 1
      %s94 = scalar_select %p91, %s92, %s93
      %p97 = pneg %p91
      %p98 = scmp.eq.s32.totalorder %s18, 3
      %p99 = por %p97, %p98
      %p100 = scmp.ne.s32.totalorder %s92, %s95
      %p101 = scmp.eq.s32.totalorder %s18, 0
      %p102 = por %p100, %p101
      %p103 = scmp.ne.s32.totalorder %s92, %s95
      %p104 = scmp.eq.s32.totalorder %s23, 3
      %p105 = por %p103, %p104
      %p106 = scmp.ne.s32.totalorder %s95, %s96
      %p107 = scmp.eq.s32.totalorder %s23, 0
      %p108 = por %p106, %p107
      %p109 = scmp.ne.s32.totalorder %s95, %s96
      %p110 = scmp.eq.s32.totalorder %s24, 3
      %p111 = por %p109, %p110
      %p113 = scmp.ne.s32.totalorder %s96, %s112
      %p114 = scmp.eq.s32.totalorder %s24, 0
      %p115 = por %p113, %p114
      %s116 = ssub.s32 %s25, %s37
      %p117 = scmp.eq.s32.totalorder %s116, 0
      %s119 = sadd.s32 %s118, 1
      %s120 = scalar_select %p117, %s118, %s119
      %p123 = pneg %p117
      %p124 = scmp.eq.s32.totalorder %s18, 3
      %p125 = por %p123, %p124
      %p126 = scmp.ne.s32.totalorder %s118, %s121
      %p127 = scmp.eq.s32.totalorder %s18, 0
      %p128 = por %p126, %p127
      %p129 = scmp.ne.s32.totalorder %s118, %s121
      %p130 = scmp.eq.s32.totalorder %s23, 3
      %p131 = por %p129, %p130
      %p132 = scmp.ne.s32.totalorder %s121, %s122
      %p133 = scmp.eq.s32.totalorder %s23, 0
      %p134 = por %p132, %p133
      %p135 = scmp.ne.s32.totalorder %s121, %s122
      %p136 = scmp.eq.s32.totalorder %s24, 3
      %p137 = por %p135, %p136
      %p139 = scmp.ne.s32.totalorder %s122, %s138
      %p140 = scmp.eq.s32.totalorder %s24, 0
      %p141 = por %p139, %p140
      %p142 = scmp.le.s32.totalorder 1, %s18
      %p143 = scmp.lt.s32.totalorder %s18, 5
      %p144 = pnand %p142, %p143
      %p145 = pneg %p144
      // Predicated region
      $region9: #{tpu_custom_call.1} parent=5 // pred_check
        _
      $region10: #{tpu_custom_call.1} parent=5 // pred_check_branch
        %147 = sbr.rel (%p144) target = $region12
      $region11: #{tpu_custom_call.1} parent=5 // pred_region
        %s148 = ssub.s32 %s18, 1
      $region12: #{tpu_custom_call.1} parent=5 // pred_fallthru
        _
      %p149 = scmp.lt.s32.totalorder %s18, 4
      // Predicated region
      $region13: #{tpu_custom_call.1} parent=5 // pred_check
        %p150 = pneg %p149
      $region14: #{tpu_custom_call.1} parent=5 // pred_check_branch
        %152 = sbr.rel (%p150) target = $region16
      $region15: #{tpu_custom_call.1} parent=5 // pred_region
        // Predicated region
        $region17: #{tpu_custom_call.1} parent=15 // pred_check
          %p153 = pneg %p50
        $region18: #{tpu_custom_call.1} parent=15 // pred_check_branch
          %155 = sbr.rel (%p153) target = $region20
        $region19: #{tpu_custom_call.1} parent=15 // pred_region
          %s156 = sand.u32 %s40, 1
          %s157 = scalar_lea.sflag [#allocation5], %s156
          %s158 = sand.u32 %s40, 1
          %s159 = smul.addr %s158, 4
          %s160 = scalar_lea.vmem [#allocation4], %s159
          %s162 = ssub.s32 64, 64
          %163 = vsyncadd %s157, %s162
          %s164 = smul.addr %s25, 64
          %s165 = scalar_lea.hbm %s0, %s164
          %s167 = sshll.u32 %s160, 4
          %s168 = int_to_ptr.vmem [resolvable:$true] %s167
          %170 = dma.hbm_to_vmem [thread:$0]  %s165, 64, %s168, %s157
        $region20: #{tpu_custom_call.1} parent=15 // pred_fallthru
          _
        // Predicated region
        $region21: #{tpu_custom_call.1} parent=15 // pred_check
          %p171 = pneg %p76
        $region22: #{tpu_custom_call.1} parent=15 // pred_check_branch
          %173 = sbr.rel (%p171) target = $region24
        $region23: #{tpu_custom_call.1} parent=15 // pred_region
          %s174 = sand.u32 %s66, 1
          %s175 = scalar_lea.sflag [#allocation8], %s174
          %s176 = sand.u32 %s66, 1
          %s177 = smul.addr %s176, 16
          %s178 = scalar_lea.vmem [#allocation7], %s177
          %s180 = ssub.s32 256, 256
          %181 = vsyncadd %s175, %s180
          %s182 = smul.addr %s26, 64
          %s183 = scalar_lea.hbm %s1, %s182
          %s184 = sshll.u32 %s178, 4
          %s185 = int_to_ptr.vmem [resolvable:$true] %s184
          %190 = dma.hbm_to_vmem [thread:$0]  %s183, 256, %s185, %s175, 128, 64, 4
        $region24: #{tpu_custom_call.1} parent=15 // pred_fallthru
          _
        // Predicated region
        $region25: #{tpu_custom_call.1} parent=15 // pred_check
          %p191 = pneg %p102
        $region26: #{tpu_custom_call.1} parent=15 // pred_check_branch
          %193 = sbr.rel (%p191) target = $region28
        $region27: #{tpu_custom_call.1} parent=15 // pred_region
          %p194 = scmp.lt.s32.totalorder %s26, 1
          %s195 = scalar_select %p194, %s26, 1
          %s196 = scalar_lea.vmem %s2, %s195
        $region28: #{tpu_custom_call.1} parent=15 // pred_fallthru
          _
      $region16: #{tpu_custom_call.1} parent=5 // pred_fallthru
        _
      %p197 = scmp.le.s32.totalorder 1, %s18
      %p198 = scmp.lt.s32.totalorder %s18, 5
      %p199 = pnand %p197, %p198
      %p200 = pneg %p199
      // Predicated region
      $region29: #{tpu_custom_call.1} parent=5 // pred_check
        _
      $region30: #{tpu_custom_call.1} parent=5 // pred_check_branch
        %202 = sbr.rel (%p199) target = $region32
      $region31: #{tpu_custom_call.1} parent=5 // pred_region
        %s203 = ssub.s32 %s18, 1
        %s204 = sand.u32 %s43, 1
        %s205 = scalar_lea.sflag [#allocation5], %s204
        %s206 = sand.u32 %s43, 1
        %s207 = smul.addr %s206, 4
        %s208 = scalar_lea.vmem [#allocation4], %s207
        // Predicated region
        $region33: #{tpu_custom_call.1} parent=31 // pred_check
          %p209 = pneg %p56
        $region34: #{tpu_custom_call.1} parent=31 // pred_check_branch
          %211 = sbr.rel (%p209) target = $region36
        $region35: #{tpu_custom_call.1} parent=31 // pred_region
          %212 = dma.done %s205, 64
        $region36: #{tpu_custom_call.1} parent=31 // pred_fallthru
          _
        %s213 = sand.u32 %s69, 1
        %s214 = scalar_lea.sflag [#allocation8], %s213
        %s215 = sand.u32 %s69, 1
        %s216 = smul.addr %s215, 16
        %s217 = scalar_lea.vmem [#allocation7], %s216
        // Predicated region
        $region37: #{tpu_custom_call.1} parent=31 // pred_check
          %p218 = pneg %p82
        $region38: #{tpu_custom_call.1} parent=31 // pred_check_branch
          %220 = sbr.rel (%p218) target = $region40
        $region39: #{tpu_custom_call.1} parent=31 // pred_region
          %221 = dma.done %s214, 256
        $region40: #{tpu_custom_call.1} parent=31 // pred_fallthru
          _
        %s222 = sand.u32 %s43, 1
        %s223 = scalar_lea.sflag [#allocation5], %s222
        %s224 = sand.u32 %s43, 1
        %s225 = smul.addr %s224, 4
        %s226 = scalar_lea.vmem [#allocation4], %s225
        %p227 = pneg %p56
        %p228 = pneg %p53
        %s229 = sand.u32 %s69, 1
        %s230 = scalar_lea.sflag [#allocation8], %s229
        %s231 = sand.u32 %s69, 1
        %s232 = smul.addr %s231, 16
        %s233 = scalar_lea.vmem [#allocation7], %s232
        %p234 = pneg %p82
        %p235 = pneg %p79
        %p236 = scmp.lt.s32.totalorder %s28, 1
        %s237 = scalar_select %p236, %s28, 1
        %s238 = scalar_lea.vmem %s2, %s237
        %p239 = pneg %p108
        %p240 = pneg %p105
        %p241 = pneg %p134
        %p242 = pneg %p131
        %s243 = sand.u32 %s121, 1
        %s244 = scalar_lea.sflag [#allocation6], %s243
        %s245 = sand.u32 %s121, 1
        %s246 = smul.addr %s245, 16
        %s247 = scalar_lea.vmem [#allocation9], %s246
        %p248 = scmp.lt.s32.totalorder %s28, 1
        %s249 = scalar_select %p248, %s28, 1
        %s250 = scalar_lea.vmem %s2, %s249
        %p252 = scmp.eq.s32.totalorder %s28, 0
        // Predicated region
        $region41: #{tpu_custom_call.1} parent=31 // pred_check
          %p253 = pneg %p252
        $region42: #{tpu_custom_call.1} parent=31 // pred_check_branch
          %255 = sbr.rel (%p253) target = $region44
        $region43: #{tpu_custom_call.1} parent=31 // pred_region
          %256 = vst [vmem:[#allocation2] sm:$0xff] -inf
          %257 = vst [vmem:[#allocation3] sm:$0xff] 0.0
        $region44: #{tpu_custom_call.1} parent=31 // pred_fallthru
          _
        %v258 = vld [vmem:[%s208] sm:$0xf]
        %v259 = vld [vmem:[%s217] sm:$0xf]
        %v260 = vld [vmem:[%s217 + $0x4] sm:$0xf]
        %v261 = vld [vmem:[%s217 + $0x8] sm:$0xf]
        %v262 = vld [vmem:[%s217 + $0xc] sm:$0xf]
        %v263 = vld [vmem:[%s250] sm:$0x1]
        %v265 = vlaneseq
        %v266 = vshrl.u32 %v265, 7
        %v267 = vsub.s32 0, %v266
        %v268 = vrot.slane %v263, %v267
        %v274 = vunpack.c.l.b16 %v259
        %v275 = vunpack.c.l.b16 %v260
        %v276 = vunpack.c.l.b16 %v261
        %v277 = vunpack.c.l.b16 %v262
        %v278 = vpack.c.b16 %v275, %v274
        %v279 = vpack.c.b16 %v277, %v276
        %vm282 = vcmask 261120
        %v284 = vsel %vm282, %v258, 0
        %286 = vmatprep.subr.bf16.mxu0 0
        %287 = vmatpush1.bf16.msra.mxu0 0
        %288 = vmatprep.subr.bf16.mxu0 0
        %289 = vmatpush1.bf16.msra.mxu0 0
        %290 = vmatprep.subr.bf16.mxu0 0
        %291 = vmatpush1.bf16.msra.mxu0 0
        %292 = vmatprep.subr.bf16.mxu0 0
        %293 = vmatpush1.bf16.msra.mxu0 0
        %294 = vmatprep.subr.bf16.mxu0 0
        %295 = vmatpush1.bf16.msra.mxu0 0
        %296 = vmatprep.subr.bf16.mxu0 0
        %297 = vmatpush1.bf16.msra.mxu0 0
        %298 = vmatprep.subr.bf16.mxu0 0
        %299 = vmatpush1.bf16.msra.mxu0 %v279
        %300 = vmatprep.subr.bf16.mxu0 0
        %301 = vmatpush1.bf16.msra.mxu0 %v278
        %302 = vmatprep.subr.bf16.mxu0 0
        %303 = vmatpush2.bf16.msra.mxu0 0
        %304 = vmatprep.subr.bf16.mxu0 0
        %305 = vmatpush2.bf16.msra.mxu0 0
        %306 = vmatprep.subr.bf16.mxu0 0
        %307 = vmatpush2.bf16.msra.mxu0 0
        %308 = vmatprep.subr.bf16.mxu0 0
        %309 = vmatpush2.bf16.msra.mxu0 0
        %310 = vmatprep.subr.bf16.mxu0 0
        %311 = vmatpush2.bf16.msra.mxu0 0
        %312 = vmatprep.subr.bf16.mxu0 0
        %313 = vmatpush2.bf16.msra.mxu0 0
        %314 = vmatprep.subr.bf16.mxu0 0
        %315 = vmatpush2.bf16.msra.mxu0 0
        %316 = vmatprep.subr.bf16.mxu0 0
        %317 = vmatpush2.bf16.msra.mxu0 0
        %318 = vmatprep.mubr.bf16.mxu0 0
        %319 = vmatmul.mubr.bf16.gmra.mxu0 %v284
        %v320 = vpop.f32.mrf.mxu0
        %v321 = vadd.f32 %v268, %v320
        %v322 = vpop.f32.mrf.mxu0
        %v323 = vpop.f32.mrf.mxu0
        %v324 = vpop.f32.mrf.mxu0
        %325 = vdwg.mxu0
        %v326 = vld [vmem:[#allocation2] sm:$0xff]
        %327 = vmax.xlane.f32.xlu0 %v321
        %v328 = vpop.xlane.xlu0 %327
        %v329 = vmax.f32 %v326, %v328
        %331 = vset.pattern.permute.xlu0 0
        %332 = vperm.xlu0 %331, %v329
        %v333 = vpop.permute.xlu0 %332
        %v335 = vsub.f32 %v321, %v333
        %v336 = vmul.f32 %v335, 1.442695
        %v337 = vpow.pop %v336
        %338 = vadd.xlane.f32.xlu0 %v337
        %v339 = vpop.xlane.xlu0 %338
        %v340 = vsub.f32 %v326, %v329
        %v341 = vmul.f32 %v340, 1.442695
        %v342 = vpow.pop %v341
        %v343 = vld [vmem:[#allocation3] sm:$0xff]
        %v344 = vmul.f32 %v342, %v343
        %v345 = vadd.f32 %v344, %v339
        %346 = vst [vmem:[#allocation3] sm:$0xff] %v345
        %347 = vst [vmem:[#allocation2] sm:$0xff] %v329
        %s348 = smul.u32 %s28, 128
        %s349 = sshra.s32 %s348, 7
        %s350 = sand.u32 %s348, 127
        %s351 = smul.addr %s349, 8
        %s352 = scalar_lea.vmem %s247, %s351 [#allocation9]
        %353 = vst [vmem:[%s352] sm:$0xff] %v321
        %p354 = scmp.eq.s32.totalorder %s28, 1
        // Predicated region
        $region45: #{tpu_custom_call.1} parent=31 // pred_check
          %p355 = pneg %p354
        $region46: #{tpu_custom_call.1} parent=31 // pred_check_branch
          %357 = sbr.rel (%p355) target = $region48
        $region47: #{tpu_custom_call.1} parent=31 // pred_region
          %v358 = vld [vmem:[#allocation2] sm:$0xff]
          %v359 = vld [vmem:[#allocation3] sm:$0xff]
          %v360 = vlog2.pop %v359
          %v361 = vmul.f32 %v360, 0.6931472
          %v362 = vadd.f32 %v358, %v361
          %v363 = vld [vmem:[%s247] sm:$0xff]
          %365 = vset.pattern.permute.xlu0 0
          %366 = vperm.xlu0 %365, %v362
          %v367 = vpop.permute.xlu0 %366
          %v369 = vsub.f32 %v363, %v367
          %370 = vst [vmem:[%s247] sm:$0xff] %v369
          %s371 = scalar_lea.vmem %s247, 8 [#allocation9]
          %v372 = vld [vmem:[%s371] sm:$0xff]
          %v373 = vsub.f32 %v372, %v367
          %374 = vst [vmem:[%s371] sm:$0xff] %v373
        $region48: #{tpu_custom_call.1} parent=31 // pred_fallthru
          _
        %s375 = sand.u32 %s121, 1
        %s376 = scalar_lea.sflag [#allocation6], %s375
        %s377 = sand.u32 %s121, 1
        %s378 = smul.addr %s377, 16
        %s379 = scalar_lea.vmem [#allocation9], %s378
        // Predicated region
        $region49: #{tpu_custom_call.1} parent=31 // pred_check
          %p380 = pneg %p131
        $region50: #{tpu_custom_call.1} parent=31 // pred_check_branch
          %382 = sbr.rel (%p380) target = $region52
        $region51: #{tpu_custom_call.1} parent=31 // pred_region
          %s384 = ssub.s32 256, 256
          %385 = vsyncadd %s376, %s384
          %s386 = smul.addr %s27, 2
          %s387 = smul.addr %s386, 128
          %s388 = scalar_lea.hbm %s3, %s387
          %s390 = sshll.u32 %s379, 4
          %s391 = int_to_ptr.vmem [resolvable:$true] %s390
          %393 = dma.vmem_to_hbm [thread:$0]  %s391, 256, %s388, %s376
        $region52: #{tpu_custom_call.1} parent=31 // pred_fallthru
          _
      $region32: #{tpu_custom_call.1} parent=5 // pred_fallthru
        _
      %p394 = scmp.le.s32.totalorder 2, %s18
      // Predicated region
      $region53: #{tpu_custom_call.1} parent=5 // pred_check
        %p395 = pneg %p394
      $region54: #{tpu_custom_call.1} parent=5 // pred_check_branch
        %397 = sbr.rel (%p395) target = $region56
      $region55: #{tpu_custom_call.1} parent=5 // pred_region
        %s398 = ssub.s32 %s18, 2
        // Predicated region
        $region57: #{tpu_custom_call.1} parent=55 // pred_check
          %p399 = pneg %p137
        $region58: #{tpu_custom_call.1} parent=55 // pred_check_branch
          %401 = sbr.rel (%p399) target = $region60
        $region59: #{tpu_custom_call.1} parent=55 // pred_region
          %s402 = sand.u32 %s122, 1
          %s403 = scalar_lea.sflag [#allocation6], %s402
          %s404 = sand.u32 %s122, 1
          %s405 = smul.addr %s404, 16
          %s406 = scalar_lea.vmem [#allocation9], %s405
          %407 = dma.done %s403, 256
        $region60: #{tpu_custom_call.1} parent=55 // pred_fallthru
          _
      $region56: #{tpu_custom_call.1} parent=5 // pred_fallthru
        _
    $region6: #{tpu_custom_call.1} parent=1 // loop_footer
      %s22 = sadd.s32 1, %s18
    $region7: #{tpu_custom_call.1} parent=1 // loop_footer_branch
      %17 = sbr.rel target = $region3
    $region8: #{tpu_custom_call.1} parent=1 // loop_exit
      _
    %408 = vsyncpa [#allocation5], 1
    %s409 = scalar_lea.sflag [#allocation5], 1
    %410 = vsyncpa %s409, 1
    %411 = vsyncpa [#allocation8], 1
    %s412 = scalar_lea.sflag [#allocation8], 1
    %413 = vsyncpa %s412, 1
    %414 = vsyncpa [#allocation6], 1
    %s415 = scalar_lea.sflag [#allocation6], 1
    %416 = vsyncpa %s415, 1

</llo_original>
